<compile_context>
chip_gen: v7x
topology: tpu7x:2x2x1
jax: 0.10.0
libtpu: 0.0.40
codegen_flags: <defaults>
</compile_context>

<pallas_src>
import jax
import jax.numpy as jnp
from jax.experimental import pallas as pl
from jax.experimental.pallas import tpu as pltpu


def global_gnn_kernel(x_ref, gamma_ref, beta_ref, A_ref, W_ref, b_ref, o_ref):
    B, C, S = x_ref.shape
    H = W_ref.shape[1]

    # ---- BatchNorm1d (training-mode batch stats, biased var), single pass ----
    s1 = jnp.zeros((C, 1), jnp.float32)
    s2 = jnp.zeros((C, 1), jnp.float32)
    x_rows = []
    for b in range(B):                       # B is small & static: unrolled
        xb = x_ref[b]                        # (C, S), already f32
        x_rows.append(xb)
        s1 = s1 + jnp.sum(xb, axis=1, keepdims=True)
        s2 = s2 + jnp.sum(xb * xb, axis=1, keepdims=True)
    inv_n = 1.0 / (B * S)
    mean = s1 * inv_n                                       # (C, 1)
    var = s2 * inv_n - mean * mean                          # biased variance
    scale = gamma_ref[...] * jax.lax.rsqrt(var + 1e-5)      # (C, 1)  gamma/std
    shift = beta_ref[...] - mean * scale                    # (C, 1)

    # normalized activations, whole batch stacked on the leading dim: (B*C, S)
    xn2 = jnp.concatenate([xb * scale + shift for xb in x_rows], axis=0)

    # ---- Linear first (associativity => fewer FLOPs), one whole-batch matmul ----
    z = jnp.dot(xn2, W_ref[...], preferred_element_type=jnp.float32)   # (B*C, H)
    # NOTE: at MXU-scale shapes, cast xn2/W to bf16 here (f32 accumulate).

    # ---- symmetric adjacency: relu(A + A^T) / 2, one whole-batch matmul ----
    A = A_ref[...]                                          # (C, C)
    A_sym = jnp.maximum(A + A.T, 0.0) * 0.5
    # rearrange z (B*C, H) -> (C, B*H) with static sublane slices + lane concat
    z_t = jnp.concatenate([z[b * C:(b + 1) * C, :] for b in range(B)], axis=1)
    y_t = jnp.dot(A_sym, z_t, preferred_element_type=jnp.float32)      # (C, B*H)

    # ---- bias + ReLU (bias tiled once, hoisted out of any loop) ----
    bias_t = jnp.concatenate([b_ref[...]] * B, axis=1)      # (1, B*H)
    y_t = jnp.maximum(y_t + bias_t, 0.0)                    # (C, B*H)

    # ---- flatten to (B, C*H): one lane-dense full-block store ----
    rows = []
    for b in range(B):
        rows.append(jnp.concatenate(
            [y_t[c:c + 1, b * H:(b + 1) * H] for c in range(C)], axis=1))  # (1, C*H)
    out = jnp.concatenate(rows, axis=0)                     # (B, C*H)
    o_ref[...] = out.astype(o_ref.dtype)


def global_gnn_forward(x, gamma, beta, A, W, b):
    """x: (B, C, S) float32 -> (B, C*H) float32."""
    B, C, S = x.shape
    H = W.shape[1]
    out = pl.pallas_call(
        global_gnn_kernel,
        out_shape=jax.ShapeDtypeStruct((B, C * H), x.dtype),
        grid=(1,),
        in_specs=[
            pl.BlockSpec((B, C, S), lambda i: (0, 0, 0)),
            pl.BlockSpec((C, 1), lambda i: (0, 0)),
            pl.BlockSpec((C, 1), lambda i: (0, 0)),
            pl.BlockSpec((C, C), lambda i: (0, 0)),
            pl.BlockSpec((S, H), lambda i: (0, 0)),
            pl.BlockSpec((1, H), lambda i: (0, 0)),
        ],
        out_specs=pl.BlockSpec((B, C * H), lambda i: (0, 0)),
        compiler_params=pltpu.CompilerParams(
            dimension_semantics=("arbitrary",)),
    )(x, gamma, beta, A, W, b)
    # Rearrange('b c s -> b (c s)') is already done inside the kernel.
    return out


def global_gnn_reference(x, gamma, beta, A, W, b):
    """Plain-JAX reference for correctness check."""
    mean = jnp.mean(x, axis=(0, 2), keepdims=True)
    var = jnp.mean((x - mean) ** 2, axis=(0, 2), keepdims=True)
    xn = (x - mean) * jax.lax.rsqrt(var + 1e-5)
    xn = xn * gamma[None] + beta[None]
    A_sym = jnp.maximum(A + A.T, 0.0) * 0.5
    h = jnp.einsum("ij,bjs->bis", A_sym, xn)
    y = jnp.maximum(jnp.einsum("bcs,sh->bch", h, W) + b[0][None, None, :], 0.0)
    return y.reshape(x.shape[0], -1)


if __name__ == "__main__":
    # Small shapes consistent with the module: input_size = (1, C, S)
    B, C, S, H = 2, 8, 16, 32

    key = jax.random.PRNGKey(0)
    kx, ka, kw, kb, kg, kbe = jax.random.split(key, 6)

    x = jax.random.normal(kx, (B, C, S), dtype=jnp.float32)

    # global_A: xavier_normal_ over (C, C): std = sqrt(2 / (C + C))
    A = jax.random.normal(ka, (C, C), dtype=jnp.float32) * jnp.sqrt(2.0 / (C + C))

    # Linear(S, H): PyTorch weight is (H, S); we pre-transpose to (S, H).
    bound = 1.0 / jnp.sqrt(S)
    W = jax.random.uniform(kw, (S, H), dtype=jnp.float32, minval=-bound, maxval=bound)
    b = jax.random.uniform(kb, (1, H), dtype=jnp.float32, minval=-bound, maxval=bound)

    # BatchNorm1d affine params (deterministic, non-trivial).
    gamma = 1.0 + 0.1 * jax.random.normal(kg, (C, 1), dtype=jnp.float32)
    beta = 0.1 * jax.random.normal(kbe, (C, 1), dtype=jnp.float32)

    out = global_gnn_forward(x, gamma, beta, A, W, b)
    out = jax.block_until_ready(out)

    ref = global_gnn_reference(x, gamma, beta, A, W, b)
    assert out.shape == (B, C * H), out.shape
    assert jnp.allclose(out, ref, atol=1e-4, rtol=1e-4), "mismatch vs JAX reference"

    print("KERNEL_OK")
</pallas_src>

<mosaic_0001>
module attributes {stable_mosaic.version = 11 : i64} {
  func.func @global_gnn_kernel(%arg0: i32, %arg1: memref<2x8x16xf32, #tpu.memory_space<vmem>>, %arg2: memref<8x1xf32, #tpu.memory_space<vmem>>, %arg3: memref<8x1xf32, #tpu.memory_space<vmem>>, %arg4: memref<8x8xf32, #tpu.memory_space<vmem>>, %arg5: memref<16x32xf32, #tpu.memory_space<vmem>>, %arg6: memref<1x32xf32, #tpu.memory_space<vmem>>, %arg7: memref<2x256xf32, #tpu.memory_space<vmem>>) attributes {dimension_semantics = [#tpu.dimension_semantics<arbitrary>], iteration_bounds = array<i64: 1>, scalar_prefetch = 0 : i64, scratch_operands = 0 : i64, tpu.core_type = #tpu.core_type<tc>, window_params = [{pipeline_mode = #tpu.pipeline_mode<synchronous>, transform_indices = @transform_0, window_bounds = array<i64: 2, 8, 16>}, {pipeline_mode = #tpu.pipeline_mode<synchronous>, transform_indices = @transform_1, window_bounds = array<i64: 8, 1>}, {pipeline_mode = #tpu.pipeline_mode<synchronous>, transform_indices = @transform_2, window_bounds = array<i64: 8, 1>}, {pipeline_mode = #tpu.pipeline_mode<synchronous>, transform_indices = @transform_3, window_bounds = array<i64: 8, 8>}, {pipeline_mode = #tpu.pipeline_mode<synchronous>, transform_indices = @transform_4, window_bounds = array<i64: 16, 32>}, {pipeline_mode = #tpu.pipeline_mode<synchronous>, transform_indices = @transform_5, window_bounds = array<i64: 1, 32>}, {pipeline_mode = #tpu.pipeline_mode<synchronous>, transform_indices = @transform_6, window_bounds = array<i64: 2, 256>}]} {
    %cst = arith.constant 0.000000e+00 : f32
    %0 = vector.broadcast %cst : f32 to vector<8x1xf32>
    %cst_0 = arith.constant 0.000000e+00 : f32
    %1 = vector.broadcast %cst_0 : f32 to vector<8x1xf32>
    %c0 = arith.constant 0 : index
    %c0_1 = arith.constant 0 : index
    %c0_2 = arith.constant 0 : index
    %2 = vector.load %arg1[%c0, %c0_1, %c0_2] : memref<2x8x16xf32, #tpu.memory_space<vmem>>, vector<1x8x16xf32>
    %3 = vector.shape_cast %2 : vector<1x8x16xf32> to vector<8x16xf32>
    %cst_3 = arith.constant dense<0.000000e+00> : vector<8xf32>
    %4 = vector.multi_reduction <add>, %3, %cst_3 [1] : vector<8x16xf32> to vector<8xf32>
    %5 = vector.shape_cast %4 : vector<8xf32> to vector<8x1xf32>
    %6 = arith.addf %0, %5 : vector<8x1xf32>
    %7 = arith.mulf %3, %3 : vector<8x16xf32>
    %cst_4 = arith.constant dense<0.000000e+00> : vector<8xf32>
    %8 = vector.multi_reduction <add>, %7, %cst_4 [1] : vector<8x16xf32> to vector<8xf32>
    %9 = vector.shape_cast %8 : vector<8xf32> to vector<8x1xf32>
    %10 = arith.addf %1, %9 : vector<8x1xf32>
    %c1 = arith.constant 1 : index
    %c0_5 = arith.constant 0 : index
    %c0_6 = arith.constant 0 : index
    %11 = vector.load %arg1[%c1, %c0_5, %c0_6] : memref<2x8x16xf32, #tpu.memory_space<vmem>>, vector<1x8x16xf32>
    %12 = vector.shape_cast %11 : vector<1x8x16xf32> to vector<8x16xf32>
    %cst_7 = arith.constant dense<0.000000e+00> : vector<8xf32>
    %13 = vector.multi_reduction <add>, %12, %cst_7 [1] : vector<8x16xf32> to vector<8xf32>
    %14 = vector.shape_cast %13 : vector<8xf32> to vector<8x1xf32>
    %15 = arith.addf %6, %14 : vector<8x1xf32>
    %16 = arith.mulf %12, %12 : vector<8x16xf32>
    %cst_8 = arith.constant dense<0.000000e+00> : vector<8xf32>
    %17 = vector.multi_reduction <add>, %16, %cst_8 [1] : vector<8x16xf32> to vector<8xf32>
    %18 = vector.shape_cast %17 : vector<8xf32> to vector<8x1xf32>
    %19 = arith.addf %10, %18 : vector<8x1xf32>
    %cst_9 = arith.constant 3.125000e-02 : f32
    %20 = vector.broadcast %cst_9 : f32 to vector<8x1xf32>
    %21 = arith.mulf %15, %20 : vector<8x1xf32>
    %cst_10 = arith.constant 3.125000e-02 : f32
    %22 = vector.broadcast %cst_10 : f32 to vector<8x1xf32>
    %23 = arith.mulf %19, %22 : vector<8x1xf32>
    %24 = arith.mulf %21, %21 : vector<8x1xf32>
    %25 = arith.subf %23, %24 : vector<8x1xf32>
    %c0_11 = arith.constant 0 : index
    %c0_12 = arith.constant 0 : index
    %26 = vector.load %arg2[%c0_11, %c0_12] : memref<8x1xf32, #tpu.memory_space<vmem>>, vector<8x1xf32>
    %cst_13 = arith.constant 9.99999974E-6 : f32
    %27 = vector.broadcast %cst_13 : f32 to vector<8x1xf32>
    %28 = arith.addf %25, %27 : vector<8x1xf32>
    %29 = math.rsqrt %28 : vector<8x1xf32>
    %30 = arith.mulf %26, %29 : vector<8x1xf32>
    %c0_14 = arith.constant 0 : index
    %c0_15 = arith.constant 0 : index
    %31 = vector.load %arg3[%c0_14, %c0_15] : memref<8x1xf32, #tpu.memory_space<vmem>>, vector<8x1xf32>
    %32 = arith.mulf %21, %30 : vector<8x1xf32>
    %33 = arith.subf %31, %32 : vector<8x1xf32>
    %34 = vector.broadcast %30 : vector<8x1xf32> to vector<8x16xf32>
    %35 = arith.mulf %3, %34 : vector<8x16xf32>
    %36 = vector.broadcast %33 : vector<8x1xf32> to vector<8x16xf32>
    %37 = arith.addf %35, %36 : vector<8x16xf32>
    %38 = vector.broadcast %30 : vector<8x1xf32> to vector<8x16xf32>
    %39 = arith.mulf %12, %38 : vector<8x16xf32>
    %40 = vector.broadcast %33 : vector<8x1xf32> to vector<8x16xf32>
    %41 = arith.addf %39, %40 : vector<8x16xf32>
    %42 = tpu.concatenate %37, %41 in 0 : vector<8x16xf32>, vector<8x16xf32> -> vector<16x16xf32>
    %c0_16 = arith.constant 0 : index
    %c0_17 = arith.constant 0 : index
    %43 = vector.load %arg5[%c0_16, %c0_17] : memref<16x32xf32, #tpu.memory_space<vmem>>, vector<16x32xf32>
    %cst_18 = arith.constant dense<0.000000e+00> : vector<16x32xf32>
    %44 = tpu.matmul %42, %43, %cst_18 {dimension_numbers = #tpu.dot_dimension_numbers<[1], [0], [0], [1], [0, 0, 1, 1], [], []>} : vector<16x16xf32>, vector<16x32xf32>, vector<16x32xf32> -> vector<16x32xf32>
    %c0_19 = arith.constant 0 : index
    %c0_20 = arith.constant 0 : index
    %45 = vector.load %arg4[%c0_19, %c0_20] : memref<8x8xf32, #tpu.memory_space<vmem>>, vector<8x8xf32>
    %46 = tpu.transpose %45, [1, 0] : vector<8x8xf32> -> vector<8x8xf32>
    %47 = arith.addf %45, %46 : vector<8x8xf32>
    %cst_21 = arith.constant 0.000000e+00 : f32
    %48 = vector.broadcast %cst_21 : f32 to vector<8x8xf32>
    %49 = arith.maximumf %47, %48 : vector<8x8xf32>
    %cst_22 = arith.constant 5.000000e-01 : f32
    %50 = vector.broadcast %cst_22 : f32 to vector<8x8xf32>
    %51 = arith.mulf %49, %50 : vector<8x8xf32>
    %52 = vector.extract_strided_slice %44 {offsets = [0, 0], sizes = [8, 32], strides = [1, 1]} : vector<16x32xf32> to vector<8x32xf32>
    %53 = vector.extract_strided_slice %44 {offsets = [8, 0], sizes = [8, 32], strides = [1, 1]} : vector<16x32xf32> to vector<8x32xf32>
    %54 = tpu.concatenate %52, %53 in 1 : vector<8x32xf32>, vector<8x32xf32> -> vector<8x64xf32>
    %cst_23 = arith.constant dense<0.000000e+00> : vector<8x64xf32>
    %55 = tpu.matmul %51, %54, %cst_23 {dimension_numbers = #tpu.dot_dimension_numbers<[1], [0], [0], [1], [0, 0, 1, 1], [], []>} : vector<8x8xf32>, vector<8x64xf32>, vector<8x64xf32> -> vector<8x64xf32>
    %c0_24 = arith.constant 0 : index
    %c0_25 = arith.constant 0 : index
    %56 = vector.load %arg6[%c0_24, %c0_25] : memref<1x32xf32, #tpu.memory_space<vmem>>, vector<1x32xf32>
    %57 = tpu.concatenate %56, %56 in 1 : vector<1x32xf32>, vector<1x32xf32> -> vector<1x64xf32>
    %58 = vector.broadcast %57 : vector<1x64xf32> to vector<8x64xf32>
    %59 = arith.addf %55, %58 : vector<8x64xf32>
    %cst_26 = arith.constant 0.000000e+00 : f32
    %60 = vector.broadcast %cst_26 : f32 to vector<8x64xf32>
    %61 = arith.maximumf %59, %60 : vector<8x64xf32>
    %62 = vector.extract_strided_slice %61 {offsets = [0, 0], sizes = [1, 32], strides = [1, 1]} : vector<8x64xf32> to vector<1x32xf32>
    %63 = vector.extract_strided_slice %61 {offsets = [1, 0], sizes = [1, 32], strides = [1, 1]} : vector<8x64xf32> to vector<1x32xf32>
    %64 = vector.extract_strided_slice %61 {offsets = [2, 0], sizes = [1, 32], strides = [1, 1]} : vector<8x64xf32> to vector<1x32xf32>
    %65 = vector.extract_strided_slice %61 {offsets = [3, 0], sizes = [1, 32], strides = [1, 1]} : vector<8x64xf32> to vector<1x32xf32>
    %66 = vector.extract_strided_slice %61 {offsets = [4, 0], sizes = [1, 32], strides = [1, 1]} : vector<8x64xf32> to vector<1x32xf32>
    %67 = vector.extract_strided_slice %61 {offsets = [5, 0], sizes = [1, 32], strides = [1, 1]} : vector<8x64xf32> to vector<1x32xf32>
    %68 = vector.extract_strided_slice %61 {offsets = [6, 0], sizes = [1, 32], strides = [1, 1]} : vector<8x64xf32> to vector<1x32xf32>
    %69 = vector.extract_strided_slice %61 {offsets = [7, 0], sizes = [1, 32], strides = [1, 1]} : vector<8x64xf32> to vector<1x32xf32>
    %70 = tpu.concatenate %62, %63, %64, %65, %66, %67, %68, %69 in 1 : vector<1x32xf32>, vector<1x32xf32>, vector<1x32xf32>, vector<1x32xf32>, vector<1x32xf32>, vector<1x32xf32>, vector<1x32xf32>, vector<1x32xf32> -> vector<1x256xf32>
    %71 = vector.extract_strided_slice %61 {offsets = [0, 32], sizes = [1, 32], strides = [1, 1]} : vector<8x64xf32> to vector<1x32xf32>
    %72 = vector.extract_strided_slice %61 {offsets = [1, 32], sizes = [1, 32], strides = [1, 1]} : vector<8x64xf32> to vector<1x32xf32>
    %73 = vector.extract_strided_slice %61 {offsets = [2, 32], sizes = [1, 32], strides = [1, 1]} : vector<8x64xf32> to vector<1x32xf32>
    %74 = vector.extract_strided_slice %61 {offsets = [3, 32], sizes = [1, 32], strides = [1, 1]} : vector<8x64xf32> to vector<1x32xf32>
    %75 = vector.extract_strided_slice %61 {offsets = [4, 32], sizes = [1, 32], strides = [1, 1]} : vector<8x64xf32> to vector<1x32xf32>
    %76 = vector.extract_strided_slice %61 {offsets = [5, 32], sizes = [1, 32], strides = [1, 1]} : vector<8x64xf32> to vector<1x32xf32>
    %77 = vector.extract_strided_slice %61 {offsets = [6, 32], sizes = [1, 32], strides = [1, 1]} : vector<8x64xf32> to vector<1x32xf32>
    %78 = vector.extract_strided_slice %61 {offsets = [7, 32], sizes = [1, 32], strides = [1, 1]} : vector<8x64xf32> to vector<1x32xf32>
    %79 = tpu.concatenate %71, %72, %73, %74, %75, %76, %77, %78 in 1 : vector<1x32xf32>, vector<1x32xf32>, vector<1x32xf32>, vector<1x32xf32>, vector<1x32xf32>, vector<1x32xf32>, vector<1x32xf32>, vector<1x32xf32> -> vector<1x256xf32>
    %80 = tpu.concatenate %70, %79 in 0 : vector<1x256xf32>, vector<1x256xf32> -> vector<2x256xf32>
    %c0_27 = arith.constant 0 : index
    %c0_28 = arith.constant 0 : index
    %81 = vector.load %arg7[%c0_27, %c0_28] : memref<2x256xf32, #tpu.memory_space<vmem>>, vector<2x256xf32>
    tpu.vector_store %arg7[%c0_27, %c0_28], %80 {strides = array<i32>} : memref<2x256xf32, #tpu.memory_space<vmem>>, vector<2x256xf32>,
    return
  }
  func.func @transform_0(%arg0: i32) -> (i32, i32, i32) {
    %c0_i32 = arith.constant 0 : i32
    %c0_i32_0 = arith.constant 0 : i32
    %c0_i32_1 = arith.constant 0 : i32
    %c0_i32_2 = arith.constant 0 : i32
    return %c0_i32, %c0_i32_0, %c0_i32_1 : i32, i32, i32
  }
  func.func @transform_1(%arg0: i32) -> (i32, i32) {
    %c0_i32 = arith.constant 0 : i32
    %c0_i32_0 = arith.constant 0 : i32
    %c0_i32_1 = arith.constant 0 : i32
    return %c0_i32, %c0_i32_0 : i32, i32
  }
  func.func @transform_2(%arg0: i32) -> (i32, i32) {
    %c0_i32 = arith.constant 0 : i32
    %c0_i32_0 = arith.constant 0 : i32
    %c0_i32_1 = arith.constant 0 : i32
    return %c0_i32, %c0_i32_0 : i32, i32
  }
  func.func @transform_3(%arg0: i32) -> (i32, i32) {
    %c0_i32 = arith.constant 0 : i32
    %c0_i32_0 = arith.constant 0 : i32
    %c0_i32_1 = arith.constant 0 : i32
    return %c0_i32, %c0_i32_0 : i32, i32
  }
  func.func @transform_4(%arg0: i32) -> (i32, i32) {
    %c0_i32 = arith.constant 0 : i32
    %c0_i32_0 = arith.constant 0 : i32
    %c0_i32_1 = arith.constant 0 : i32
    return %c0_i32, %c0_i32_0 : i32, i32
  }
  func.func @transform_5(%arg0: i32) -> (i32, i32) {
    %c0_i32 = arith.constant 0 : i32
    %c0_i32_0 = arith.constant 0 : i32
    %c0_i32_1 = arith.constant 0 : i32
    return %c0_i32, %c0_i32_0 : i32, i32
  }
  func.func @transform_6(%arg0: i32) -> (i32, i32) {
    %c0_i32 = arith.constant 0 : i32
    %c0_i32_0 = arith.constant 0 : i32
    %c0_i32_1 = arith.constant 0 : i32
    return %c0_i32, %c0_i32_0 : i32, i32
  }
}

</mosaic_0001>

<llo_original>
// kernel: tpu_custom_call.1
$region0: #{tpu_custom_call.1}
  #allocation0 [shape = 'u32[]', space=smem, size = 0x4, offset = 0x4, fixed_abs, tag = 'smem constant byte address 0x4 - core index']
  #allocation1 [shape = 'u32[144,128]{1,0:T(1,128)}', space=vmem, size = 0x12000, scoped, tag = 'internal scratch']
  %s0 = inlined_call_operand.vmem [shape: f32[2,8,16], index: 0, kind: input, shape index: {}]
  %s1 = inlined_call_operand.vmem [shape: f32[8,1], index: 1, kind: input, shape index: {}]
  %s2 = inlined_call_operand.vmem [shape: f32[8,1], index: 2, kind: input, shape index: {}]
  %s3 = inlined_call_operand.hbm [shape: f32[8,8], index: 3, kind: input, shape index: {}]
  %s4 = inlined_call_operand.vmem [shape: f32[16,32], index: 4, kind: input, shape index: {}]
  %s5 = inlined_call_operand.vmem [shape: f32[1,32], index: 5, kind: input, shape index: {}]
  %s6 = inlined_call_operand.hbm [shape: f32[2,256], index: 6, kind: output, shape index: {}]
  %s7 = sld [smem:[#allocation0]]
  $region38: #{tpu_custom_call.1} parent=0
    _
  %s9 = ssub.s32 1, %s7
  %s10 = scalar_select 0, %s9, %s7
  $region1: #{tpu_custom_call.1} parent=0
    #allocation2 [shape = 'u8[4096]{0}', space=vmem, size = 0x1000, scoped, tag = 'input window, operand 3, single buffered']
    #allocation3 [shape = 's32[1]{0}', space=sflag, size = 0x4, scoped, tag = 'scoped memory for tpu_custom_call.1']
    #allocation4 [shape = 's32[1]{0}', space=sflag, size = 0x4, scoped, tag = 'scoped memory for tpu_custom_call.1']
    #allocation5 [shape = 'u8[2048]{0}', space=vmem, size = 0x800, scoped, tag = 'output window, operand 0, single buffered']
    %11 = vsyncpa [#allocation3], 0
    %12 = vsyncpa [#allocation4], 0
    // Predicated region
    $region2: #{tpu_custom_call.1} parent=1 // pred_check
      _
    $region3: #{tpu_custom_call.1} parent=1 // pred_check_branch
      %14 = sbr.rel (0) target = $region5
    $region4: #{tpu_custom_call.1} parent=1 // pred_region
      _
    $region5: #{tpu_custom_call.1} parent=1 // pred_fallthru
      _
    // Predicated region
    $region6: #{tpu_custom_call.1} parent=1 // pred_check
      _
    $region7: #{tpu_custom_call.1} parent=1 // pred_check_branch
      %16 = sbr.rel (0) target = $region9
    $region8: #{tpu_custom_call.1} parent=1 // pred_region
      _
    $region9: #{tpu_custom_call.1} parent=1 // pred_fallthru
      _
    // Predicated region
    $region10: #{tpu_custom_call.1} parent=1 // pred_check
      _
    $region11: #{tpu_custom_call.1} parent=1 // pred_check_branch
      %18 = sbr.rel (0) target = $region13
    $region12: #{tpu_custom_call.1} parent=1 // pred_region
      _
    $region13: #{tpu_custom_call.1} parent=1 // pred_fallthru
      _
    // Predicated region
    $region14: #{tpu_custom_call.1} parent=1 // pred_check
      _
    $region15: #{tpu_custom_call.1} parent=1 // pred_check_branch
      %20 = sbr.rel (0) target = $region17
    $region16: #{tpu_custom_call.1} parent=1 // pred_region
      %s22 = ssub.s32 128, 128
      %23 = vsyncadd [#allocation3], %s22
      %s25 = sshll.u32 [#allocation2], 4
      %s26 = int_to_ptr.vmem [resolvable:$true] %s25
      %28 = dma.hbm_to_vmem [thread:$0]  %s3, 128, %s26, [#allocation3]
    $region17: #{tpu_custom_call.1} parent=1 // pred_fallthru
      _
    // Predicated region
    $region18: #{tpu_custom_call.1} parent=1 // pred_check
      _
    $region19: #{tpu_custom_call.1} parent=1 // pred_check_branch
      %30 = sbr.rel (0) target = $region21
    $region20: #{tpu_custom_call.1} parent=1 // pred_region
      _
    $region21: #{tpu_custom_call.1} parent=1 // pred_fallthru
      _
    // Predicated region
    $region22: #{tpu_custom_call.1} parent=1 // pred_check
      _
    $region23: #{tpu_custom_call.1} parent=1 // pred_check_branch
      %32 = sbr.rel (0) target = $region25
    $region24: #{tpu_custom_call.1} parent=1 // pred_region
      _
    $region25: #{tpu_custom_call.1} parent=1 // pred_fallthru
      _
    // Predicated region
    $region26: #{tpu_custom_call.1} parent=1 // pred_check
      _
    $region27: #{tpu_custom_call.1} parent=1 // pred_check_branch
      %34 = sbr.rel (0) target = $region29
    $region28: #{tpu_custom_call.1} parent=1 // pred_region
      %35 = dma.done [#allocation3], 128
    $region29: #{tpu_custom_call.1} parent=1 // pred_fallthru
      _
    %v36 = vld [vmem:[%s0] sm:$0xff]
    %vm37 = vcmask 130048
    %v38 = vsel %vm37, %v36, 0.0
    %39 = vadd.xlane.f32.xlu0 %v38
    %v40 = vpop.xlane.xlu0 %39
    %v41 = vadd.f32 %v40, 0.0
    %v42 = vmul.f32 %v36, %v36
    %v43 = vsel %vm37, %v42, 0.0
    %44 = vadd.xlane.f32.xlu0 %v43
    %v45 = vpop.xlane.xlu0 %44
    %v46 = vadd.f32 %v45, 0.0
    %s47 = scalar_lea.vmem %s0, 8
    %v48 = vld [vmem:[%s47] sm:$0xff]
    %v49 = vsel %vm37, %v48, 0.0
    %50 = vadd.xlane.f32.xlu0 %v49
    %v51 = vpop.xlane.xlu0 %50
    %v52 = vadd.f32 %v41, %v51
    %v53 = vmul.f32 %v48, %v48
    %v54 = vsel %vm37, %v53, 0.0
    %55 = vadd.xlane.f32.xlu0 %v54
    %v56 = vpop.xlane.xlu0 %55
    %v57 = vadd.f32 %v46, %v56
    %v58 = vmul.f32 %v52, 0.03125
    %v59 = vmul.f32 %v57, 0.03125
    %v60 = vmul.f32 %v58, %v58
    %v61 = vsub.f32 %v59, %v60
    %v62 = vld [vmem:[%s1] sm:$0xff]
    %v63 = vadd.f32 %v61, 1e-05
    %v64 = vrsqrt.pop %v63
    %v65 = vmul.f32 %v62, %v64
    %v66 = vld [vmem:[%s2] sm:$0xff]
    %v67 = vmul.f32 %v58, %v65
    %v68 = vsub.f32 %v66, %v67
    %70 = vset.pattern.permute.xlu0 0
    %71 = vperm.xlu0 %70, %v65
    %v72 = vpop.permute.xlu0 %71
    %v74 = vmul.f32 %v36, %v72
    %76 = vset.pattern.permute.xlu0 0
    %77 = vperm.xlu0 %76, %v68
    %v78 = vpop.permute.xlu0 %77
    %v80 = vadd.f32 %v74, %v78
    %v81 = vmul.f32 %v48, %v72
    %v82 = vadd.f32 %v81, %v78
    %v83 = vld [vmem:[%s4] sm:$0xff]
    %v84 = vld [vmem:[%s4 + $0x8] sm:$0xff]
    %v86 = vsel %vm37, %v80, 0
    %v89 = vsel %vm37, %v82, 0
    %91 = vmatprep.subr.mxu0 0.0
    %92 = vmatpush1.msra.mxu0 %v83
    %93 = vmatprep.subr.mxu0 0.0
    %94 = vmatpush1.msra.mxu0 %v84
    %95 = vmatprep.subr.mxu0 0.0
    %96 = vmatpush1.msra.mxu0 0.0
    %97 = vmatprep.subr.mxu0 0.0
    %98 = vmatpush1.msra.mxu0 0.0
    %99 = vmatprep.subr.mxu0 0.0
    %100 = vmatpush1.msra.mxu0 0.0
    %101 = vmatprep.subr.mxu0 0.0
    %102 = vmatpush1.msra.mxu0 0.0
    %103 = vmatprep.subr.mxu0 0.0
    %104 = vmatpush1.msra.mxu0 0.0
    %105 = vmatprep.subr.mxu0 0.0
    %106 = vmatpush1.msra.mxu0 0.0
    %107 = vmatprep.subr.mxu0 0.0
    %108 = vmatpush1.msra.mxu0 0.0
    %109 = vmatprep.subr.mxu0 0.0
    %110 = vmatpush1.msra.mxu0 0.0
    %111 = vmatprep.subr.mxu0 0.0
    %112 = vmatpush1.msra.mxu0 0.0
    %113 = vmatprep.subr.mxu0 0.0
    %114 = vmatpush1.msra.mxu0 0.0
    %115 = vmatprep.subr.mxu0 0.0
    %116 = vmatpush1.msra.mxu0 0.0
    %117 = vmatprep.subr.mxu0 0.0
    %118 = vmatpush1.msra.mxu0 0.0
    %119 = vmatprep.subr.mxu0 0.0
    %120 = vmatpush1.msra.mxu0 0.0
    %121 = vmatprep.subr.mxu0 0.0
    %122 = vmatpush1.msra.mxu0 0.0
    %123 = vmatprep.subr.mxu0 0.0
    %124 = vmatpush1.msra.mxu0 0.0
    %125 = vmatprep.subr.mxu0 0.0
    %126 = vmatpush1.msra.mxu0 0.0
    %127 = vmatprep.subr.mxu0 0.0
    %128 = vmatpush1.msra.mxu0 0.0
    %129 = vmatprep.subr.mxu0 0.0
    %130 = vmatpush1.msra.mxu0 0.0
    %131 = vmatprep.subr.mxu0 0.0
    %132 = vmatpush1.msra.mxu0 0.0
    %133 = vmatprep.subr.mxu0 0.0
    %134 = vmatpush1.msra.mxu0 0.0
    %135 = vmatprep.subr.mxu0 0.0
    %136 = vmatpush1.msra.mxu0 0.0
    %137 = vmatprep.subr.mxu0 0.0
    %138 = vmatpush1.msra.mxu0 0.0
    %139 = vmatprep.subr.mxu0 0.0
    %140 = vmatpush1.msra.mxu0 0.0
    %141 = vmatprep.subr.mxu0 0.0
    %142 = vmatpush1.msra.mxu0 0.0
    %143 = vmatprep.subr.mxu0 0.0
    %144 = vmatpush1.msra.mxu0 0.0
    %145 = vmatprep.subr.mxu0 0.0
    %146 = vmatpush1.msra.mxu0 0.0
    %147 = vmatprep.subr.mxu0 0.0
    %148 = vmatpush1.msra.mxu0 0.0
    %149 = vmatprep.subr.mxu0 0.0
    %150 = vmatpush1.msra.mxu0 0.0
    %151 = vmatprep.subr.mxu0 0.0
    %152 = vmatpush1.msra.mxu0 0.0
    %153 = vmatprep.subr.mxu0 0.0
    %154 = vmatpush1.msra.mxu0 0.0
    %155 = vmatprep.mubr.f32.mxu0 0.0
    %156 = vmatmul.mubr.f32.gmra.mrb[0].mxu0 %v86
    %v157 = vpop.f32.mrb[0].mxu0
    %v158 = vadd.f32 0.0, %v157
    %v159 = vpop.f32.mrb[0].mxu0
    %160 = vmatprep.mubr.f32.mxu0 0.0
    %161 = vmatmul.mubr.f32.gmra.mrb[0].mxu0 %v89
    %v162 = vpop.f32.mrb[0].mxu0
    %v163 = vadd.f32 0.0, %v162
    %v164 = vpop.f32.mrb[0].mxu0
    %165 = vdwg.mxu0
    %v166 = vld [vmem:[#allocation2] sm:$0xff]
    %167 = vxpose.xlu0.b32.start [1/16] %v166, 128
    %168 = vxpose.xlu0.b32.cont [2/16] 0.0, 128
    %169 = vxpose.xlu0.b32.cont [3/16] 0.0, 128
    %170 = vxpose.xlu0.b32.cont [4/16] 0.0, 128
    %171 = vxpose.xlu0.b32.cont [5/16] 0.0, 128
    %172 = vxpose.xlu0.b32.cont [6/16] 0.0, 128
    %173 = vxpose.xlu0.b32.cont [7/16] 0.0, 128
    %174 = vxpose.xlu0.b32.cont [8/16] 0.0, 128
    %175 = vxpose.xlu0.b32.cont [9/16] 0.0, 128
    %176 = vxpose.xlu0.b32.cont [10/16] 0.0, 128
    %177 = vxpose.xlu0.b32.cont [11/16] 0.0, 128
    %178 = vxpose.xlu0.b32.cont [12/16] 0.0, 128
    %179 = vxpose.xlu0.b32.cont [13/16] 0.0, 128
    %180 = vxpose.xlu0.b32.cont [14/16] 0.0, 128
    %181 = vxpose.xlu0.b32.cont [15/16] 0.0, 128
    %182 = vxpose.xlu0.b32.end [16/16] 0.0, 128
    %v183 = vpop.trf.xlu0
    %v184 = vpop.trf.xlu0
    %v185 = vpop.trf.xlu0
    %v186 = vpop.trf.xlu0
    %v187 = vpop.trf.xlu0
    %v188 = vpop.trf.xlu0
    %v189 = vpop.trf.xlu0
    %v190 = vpop.trf.xlu0
    %v191 = vpop.trf.xlu0
    %v192 = vpop.trf.xlu0
    %v193 = vpop.trf.xlu0
    %v194 = vpop.trf.xlu0
    %v195 = vpop.trf.xlu0
    %v196 = vpop.trf.xlu0
    %v197 = vpop.trf.xlu0
    %v198 = vpop.trf.xlu0
    %v199 = vadd.f32 %v166, %v183
    %v200 = vmax.f32 %v199, 0.0
    %v201 = vmul.f32 %v200, 0.5
    %203 = vrot.lane.b32.xlu0 %v163, 32
    %v204 = vpop.permute.xlu0 %203
    %vm206 = vcmask 261120
    %v207 = vsel %vm206, %v158, %v204
    %v208 = vld [vmem:[%s5] sm:$0x1]
    %v210 = vlaneseq
    %v211 = vshrl.u32 %v210, 7
    %v212 = vsub.s32 0, %v211
    %v213 = vrot.slane %v208, %v212
    %214 = vrot.lane.b32.xlu0 %v213, 32
    %v215 = vpop.permute.xlu0 %214
    %v217 = vsel %vm206, %v208, %v215
    %v218 = vlaneseq
    %v219 = vshrl.u32 %v218, 7
    %v220 = vsub.s32 0, %v219
    %v221 = vrot.slane %v217, %v220
    %vm222 = vcmask 64512
    %v224 = vsel %vm222, %v201, 0
    %226 = vmatprep.subr.mxu0 0.0
    %227 = vmatpush1.msra.mxu0 %v207
    %228 = vmatprep.subr.mxu0 0.0
    %229 = vmatpush1.msra.mxu0 0.0
    %230 = vmatprep.subr.mxu0 0.0
    %231 = vmatpush1.msra.mxu0 0.0
    %232 = vmatprep.subr.mxu0 0.0
    %233 = vmatpush1.msra.mxu0 0.0
    %234 = vmatprep.subr.mxu0 0.0
    %235 = vmatpush1.msra.mxu0 0.0
    %236 = vmatprep.subr.mxu0 0.0
    %237 = vmatpush1.msra.mxu0 0.0
    %238 = vmatprep.subr.mxu0 0.0
    %239 = vmatpush1.msra.mxu0 0.0
    %240 = vmatprep.subr.mxu0 0.0
    %241 = vmatpush1.msra.mxu0 0.0
    %242 = vmatprep.subr.mxu0 0.0
    %243 = vmatpush1.msra.mxu0 0.0
    %244 = vmatprep.subr.mxu0 0.0
    %245 = vmatpush1.msra.mxu0 0.0
    %246 = vmatprep.subr.mxu0 0.0
    %247 = vmatpush1.msra.mxu0 0.0
    %248 = vmatprep.subr.mxu0 0.0
    %249 = vmatpush1.msra.mxu0 0.0
    %250 = vmatprep.subr.mxu0 0.0
    %251 = vmatpush1.msra.mxu0 0.0
    %252 = vmatprep.subr.mxu0 0.0
    %253 = vmatpush1.msra.mxu0 0.0
    %254 = vmatprep.subr.mxu0 0.0
    %255 = vmatpush1.msra.mxu0 0.0
    %256 = vmatprep.subr.mxu0 0.0
    %257 = vmatpush1.msra.mxu0 0.0
    %258 = vmatprep.subr.mxu0 0.0
    %259 = vmatpush1.msra.mxu0 0.0
    %260 = vmatprep.subr.mxu0 0.0
    %261 = vmatpush1.msra.mxu0 0.0
    %262 = vmatprep.subr.mxu0 0.0
    %263 = vmatpush1.msra.mxu0 0.0
    %264 = vmatprep.subr.mxu0 0.0
    %265 = vmatpush1.msra.mxu0 0.0
    %266 = vmatprep.subr.mxu0 0.0
    %267 = vmatpush1.msra.mxu0 0.0
    %268 = vmatprep.subr.mxu0 0.0
    %269 = vmatpush1.msra.mxu0 0.0
    %270 = vmatprep.subr.mxu0 0.0
    %271 = vmatpush1.msra.mxu0 0.0
    %272 = vmatprep.subr.mxu0 0.0
    %273 = vmatpush1.msra.mxu0 0.0
    %274 = vmatprep.subr.mxu0 0.0
    %275 = vmatpush1.msra.mxu0 0.0
    %276 = vmatprep.subr.mxu0 0.0
    %277 = vmatpush1.msra.mxu0 0.0
    %278 = vmatprep.subr.mxu0 0.0
    %279 = vmatpush1.msra.mxu0 0.0
    %280 = vmatprep.subr.mxu0 0.0
    %281 = vmatpush1.msra.mxu0 0.0
    %282 = vmatprep.subr.mxu0 0.0
    %283 = vmatpush1.msra.mxu0 0.0
    %284 = vmatprep.subr.mxu0 0.0
    %285 = vmatpush1.msra.mxu0 0.0
    %286 = vmatprep.subr.mxu0 0.0
    %287 = vmatpush1.msra.mxu0 0.0
    %288 = vmatprep.subr.mxu0 0.0
    %289 = vmatpush1.msra.mxu0 0.0
    %290 = vmatprep.mubr.f32.mxu0 0.0
    %291 = vmatmul.mubr.f32.gmra.mrb[0].mxu0 %v224
    %v292 = vpop.f32.mrb[0].mxu0
    %v293 = vadd.f32 %v221, %v292
    %v294 = vpop.f32.mrb[0].mxu0
    %295 = vdwg.mxu0
    %v296 = vmax.f32 %v293, 0.0
    %v298 = vrot.slane %v296, 1
    %299 = vrot.lane.b32.xlu0 %v298, 32
    %v300 = vpop.permute.xlu0 %299
    %v302 = vrot.slane %v296, 2
    %303 = vrot.lane.b32.xlu0 %v302, 64
    %v304 = vpop.permute.xlu0 %303
    %v306 = vrot.slane %v296, 3
    %307 = vrot.lane.b32.xlu0 %v306, 96
    %v308 = vpop.permute.xlu0 %307
    %v310 = vrot.slane %v296, 4
    %v312 = vrot.slane %v296, 5
    %313 = vrot.lane.b32.xlu0 %v312, 32
    %v314 = vpop.permute.xlu0 %313
    %v316 = vrot.slane %v296, 6
    %317 = vrot.lane.b32.xlu0 %v316, 64
    %v318 = vpop.permute.xlu0 %317
    %v320 = vrot.slane %v296, 7
    %321 = vrot.lane.b32.xlu0 %v320, 96
    %v322 = vpop.permute.xlu0 %321
    %v324 = vsel %vm206, %v296, %v300
    %vm325 = vcmask 523264
    %v326 = vsel %vm325, %v324, %v304
    %vm327 = vcmask 785408
    %v328 = vsel %vm327, %v326, %v308
    %v329 = vsel %vm206, %v310, %v314
    %v330 = vsel %vm325, %v329, %v318
    %v331 = vsel %vm327, %v330, %v322
    %332 = vrot.lane.b32.xlu0 %v296, 96
    %v333 = vpop.permute.xlu0 %332
    %336 = vrot.lane.b32.xlu0 %v302, 32
    %v337 = vpop.permute.xlu0 %336
    %339 = vrot.lane.b32.xlu0 %v306, 64
    %v340 = vpop.permute.xlu0 %339
    %342 = vrot.lane.b32.xlu0 %v310, 96
    %v343 = vpop.permute.xlu0 %342
    %346 = vrot.lane.b32.xlu0 %v316, 32
    %v347 = vpop.permute.xlu0 %346
    %349 = vrot.lane.b32.xlu0 %v320, 64
    %v350 = vpop.permute.xlu0 %349
    %v352 = vsel %vm206, %v333, %v298
    %v353 = vsel %vm325, %v352, %v337
    %v354 = vsel %vm327, %v353, %v340
    %v355 = vsel %vm206, %v343, %v312
    %v356 = vsel %vm325, %v355, %v347
    %v357 = vsel %vm327, %v356, %v350
    %v360 = vrot.slane %v354, 7
    %v361 = vrot.slane %v357, 7
    %vm364 = vcmask 1040384
    %v365 = vsel %vm364, %v328, %v360
    %v366 = vsel %vm364, %v331, %v361
    %v369 = vcombine.low %v365, %v366
    %v371 = vunpack.c.l.s4 1983009808
    %v372 = vunpack.c.0.s8 %v371
    %v373 = vlaneseq
    %v374 = vshrl.u32 %v373, 7
    %v375 = vsub.s32 %v372, %v374
    %v376 = vrot.slane %v369, %v375
    %378 = vst [vmem:[#allocation5] sm:$0xf] %v376
    // Predicated region
    $region30: #{tpu_custom_call.1} parent=1 // pred_check
      _
    $region31: #{tpu_custom_call.1} parent=1 // pred_check_branch
      %380 = sbr.rel (0) target = $region33
    $region32: #{tpu_custom_call.1} parent=1 // pred_region
      %s382 = ssub.s32 64, 64
      %383 = vsyncadd [#allocation4], %s382
      %s385 = sshll.u32 [#allocation5], 4
      %s386 = int_to_ptr.vmem [resolvable:$true] %s385
      %388 = dma.vmem_to_hbm [thread:$0]  %s386, 64, %s6, [#allocation4]
    $region33: #{tpu_custom_call.1} parent=1 // pred_fallthru
      _
    // Predicated region
    $region34: #{tpu_custom_call.1} parent=1 // pred_check
      _
    $region35: #{tpu_custom_call.1} parent=1 // pred_check_branch
      %390 = sbr.rel (0) target = $region37
    $region36: #{tpu_custom_call.1} parent=1 // pred_region
      %391 = dma.done [#allocation4], 64
    $region37: #{tpu_custom_call.1} parent=1 // pred_fallthru
      _
    %392 = vsyncpa [#allocation3], 1
    %393 = vsyncpa [#allocation4], 1

</llo_original>
